<compile_context>
chip_gen: v7x
topology: tpu7x:2x2x1
jax: 0.10.0
libtpu: 0.0.40
codegen_flags: <defaults>
</compile_context>

<pallas_src>
import jax
import jax.numpy as jnp
from jax.experimental import pallas as pl
from jax.experimental.pallas import tpu as pltpu

# f32 slab: W1 [0:32,0:5], b1 [32:64,0:1], b2 [64:96,0:1], b3 [96:98,0:1]
_F32_SLAB_SHAPE = (104, 128)
# bf16 slab: W2 [0:32,0:32], W3 (zero-padded to 16 rows) [32:48,0:32]
_BF16_SLAB_SHAPE = (48, 128)


def _round_up(n, m):
    return ((n + m - 1) // m) * m


# ---------------------------------------------------------------------------
# Pallas kernel: fused 3-layer MLP forward on one (5, TB) feature-major tile.
# ---------------------------------------------------------------------------
def mlp_kernel(x_ref, pf_ref, pb_ref, o_ref):
    x = x_ref[...]                                   # (5, TB) f32, batch on lanes

    # ---- layer 1: 5 -> 32 on the VPU ---------------------------------------
    # K=5 is far too shallow for the MXU; five broadcast FMAs on the otherwise
    # idle VALU remove ~1/3 of the MXU work essentially for free.
    w1 = pf_ref[0:32, 0:5]                           # (32, 5)  f32
    b1 = pf_ref[32:64, 0:1]                          # (32, 1)  f32
    h1 = b1 + w1[:, 0:1] * x[0:1, :]
    for k in range(1, 5):                            # static, fully unrolled
        h1 = h1 + w1[:, k:k + 1] * x[k:k + 1, :]
    h1 = jnp.maximum(h1, 0.0)                        # (32, TB) f32

    # ---- layer 2: 32 -> 32 on the MXU (bf16 operands, f32 accumulation) ----
    w2 = pb_ref[0:32, 0:32]                          # (32, 32) bf16
    b2 = pf_ref[64:96, 0:1]                          # (32, 1)  f32
    h2 = jnp.dot(w2, h1.astype(jnp.bfloat16),
                 preferred_element_type=jnp.float32) + b2
    h2 = jnp.maximum(h2, 0.0)                        # (32, TB) f32

    # ---- layer 3: 32 -> 2 (rows zero-padded to 16) on the MXU ---------------
    w3 = pb_ref[32:48, 0:32]                         # (16, 32) bf16, rows 2:16 zero
    b3 = pf_ref[96:98, 0:1]                          # (2, 1)   f32
    y = jnp.dot(w3, h2.astype(jnp.bfloat16),
                preferred_element_type=jnp.float32)  # (16, TB) f32
    o_ref[...] = jnp.tanh(y[0:2, :] + b3)            # (2, TB)  lane-dense store


# ---------------------------------------------------------------------------
# Feature-major entry point (preferred contract: zero transposes anywhere).
# ---------------------------------------------------------------------------
def external_force_predictor_feature_major(xt, packed_f32, packed_bf16, *, tb=8192):
    """xt: (5, B) float32 -> (2, B) float32."""
    feat, B = xt.shape
    assert feat == 5

    # Tile sizing: big tiles amortize per-step overhead; clamp for small
    # batches so we do not over-pad.  Live VMEM at tb=8192 is ~<6 MiB.
    tb = _round_up(max(128, tb), 512)
    tb = min(tb, _round_up(max(B, 1), 512))
    # v7x megacore: never let one tile swallow a large batch -- grid=(1,)
    # leaves one TensorCore idle.  (No-op on 1-TC v5e/v6e.)
    if _round_up(B, tb) == tb and tb >= 1024:
        tb //= 2                                     # stays a multiple of 256
    Bp = _round_up(B, tb)
    if Bp != B:
        xt = jnp.pad(xt, ((0, 0), (0, Bp - B)))

    out = pl.pallas_call(
        mlp_kernel,
        out_shape=jax.ShapeDtypeStruct((2, Bp), jnp.float32),
        grid_spec=pltpu.PrefetchScalarGridSpec(
            num_scalar_prefetch=0,
            grid=(Bp // tb,),
            in_specs=[
                pl.BlockSpec((5, tb), lambda i: (0, i)),           # streamed x
                # TODO(synk): pipeline_mode=pl.Buffered(1) on the two resident
                # weight slabs would drop their unused second buffers (~65 KB);
                # skipped as the win is negligible vs. lowering risk.
                pl.BlockSpec(_F32_SLAB_SHAPE, lambda i: (0, 0)),   # resident W1/biases
                pl.BlockSpec(_BF16_SLAB_SHAPE, lambda i: (0, 0)),  # resident W2/W3
            ],
            out_specs=pl.BlockSpec((2, tb), lambda i: (0, i)),
        ),
        compiler_params=pltpu.CompilerParams(
            dimension_semantics=("parallel",),
            # Keeps tiles up to ~32K columns legal on v5e (16 MiB default
            # scoped limit); harmless on v6e/v7x.
            vmem_limit_bytes=32 * 1024 * 1024,
        ),
        cost_estimate=pl.CostEstimate(
            flops=2 * (5 * 32 + 32 * 32 + 32 * 2) * Bp,
            transcendentals=2 * Bp,
            bytes_accessed=(5 + 2) * 4 * Bp + 104 * 128 * 4 + 48 * 128 * 2,
        ),
    )(xt, packed_f32, packed_bf16)

    return out[:, :B]


# ---------------------------------------------------------------------------
# PyTorch-contract wrapper: (B, 5) -> (B, 2).  The two transposes are pure
# layout plumbing; callers that can hold feature-major data should use
# external_force_predictor_feature_major directly and skip them.
# ---------------------------------------------------------------------------
def external_force_predictor(x, packed_f32, packed_bf16, *, tb=8192):
    yt = external_force_predictor_feature_major(
        jnp.transpose(x), packed_f32, packed_bf16, tb=tb)
    return jnp.transpose(yt)


# ---------------------------------------------------------------------------
# Parameter setup (plain JAX glue): deterministic init + spectral norm.
# spectral_norm divides the raw weight by its largest singular value; we use
# the exact sigma (SVD), i.e. the converged value of PyTorch's power iteration.
# Weights keep torch.nn.Linear orientation (out_features, in_features), which
# is exactly what the feature-major kernel (W @ x) wants.
# ---------------------------------------------------------------------------
def _linear_init(key, in_f, out_f):
    kw, kb = jax.random.split(key)
    bound = 1.0 / jnp.sqrt(in_f)
    w = jax.random.uniform(kw, (out_f, in_f), jnp.float32, -bound, bound)
    b = jax.random.uniform(kb, (out_f,), jnp.float32, -bound, bound)
    return w, b


def _spectral_normalize(w):
    sigma = jnp.linalg.svd(w, compute_uv=False)[0]
    return w / sigma


def make_raw_params(key):
    k1, k2, k3 = jax.random.split(key, 3)
    w1, b1 = _linear_init(k1, 5, 32)
    w2, b2 = _linear_init(k2, 32, 32)
    w3, b3 = _linear_init(k3, 32, 2)
    return (_spectral_normalize(w1), b1,
            _spectral_normalize(w2), b2,
            _spectral_normalize(w3), b3)


def pack_params(w1, b1, w2, b2, w3, b3):
    pf = jnp.zeros(_F32_SLAB_SHAPE, jnp.float32)
    pf = pf.at[0:32, 0:5].set(w1)
    pf = pf.at[32:64, 0:1].set(b1[:, None])
    pf = pf.at[64:96, 0:1].set(b2[:, None])
    pf = pf.at[96:98, 0:1].set(b3[:, None])
    pb = jnp.zeros(_BF16_SLAB_SHAPE, jnp.bfloat16)
    pb = pb.at[0:32, 0:32].set(w2.astype(jnp.bfloat16))
    pb = pb.at[32:34, 0:32].set(w3.astype(jnp.bfloat16))
    return pf, pb


def reference_forward(x, raw_params):
    w1, b1, w2, b2, w3, b3 = raw_params
    hp = jax.lax.Precision.HIGHEST
    h1 = jnp.maximum(jnp.dot(x, w1.T, precision=hp) + b1, 0.0)
    h2 = jnp.maximum(jnp.dot(h1, w2.T, precision=hp) + b2, 0.0)
    return jnp.tanh(jnp.dot(h2, w3.T, precision=hp) + b3)


if __name__ == "__main__":
    key = jax.random.PRNGKey(0)
    kx, kp = jax.random.split(key)

    raw = make_raw_params(kp)
    pf, pb = pack_params(*raw)

    # bf16 matmuls adopted per the perf review -> tolerance relaxed
    # deliberately (tanh outputs live in [-1, 1]; measured error ~1e-3).
    TOL = 2e-2

    # Case 1: small batch, single tile, exercises column padding (200 -> 512).
    B1 = 200
    x1 = jax.random.normal(kx, (B1, 5), dtype=jnp.float32)
    out1 = jax.block_until_ready(external_force_predictor(x1, pf, pb))
    ref1 = reference_forward(x1, raw)
    assert out1.shape == (B1, 2), out1.shape
    assert float(jnp.max(jnp.abs(out1 - ref1))) < TOL, \
        float(jnp.max(jnp.abs(out1 - ref1)))

    # Case 2: exercises the >=2-step grid path (v7x dual-TC split) + padding.
    B2 = 1500
    x2 = jax.random.normal(jax.random.fold_in(kx, 1), (B2, 5), dtype=jnp.float32)
    out2 = jax.block_until_ready(external_force_predictor(x2, pf, pb))
    ref2 = reference_forward(x2, raw)
    assert out2.shape == (B2, 2), out2.shape
    assert float(jnp.max(jnp.abs(out2 - ref2))) < TOL, \
        float(jnp.max(jnp.abs(out2 - ref2)))

    print("KERNEL_OK")
</pallas_src>

<mosaic_0001>
module attributes {stable_mosaic.version = 11 : i64} {
  func.func @mlp_kernel(%arg0: i32, %arg1: memref<5x512xf32, #tpu.memory_space<vmem>>, %arg2: memref<104x128xf32, #tpu.memory_space<vmem>>, %arg3: memref<48x128xbf16, #tpu.memory_space<vmem>>, %arg4: memref<2x512xf32, #tpu.memory_space<vmem>>) attributes {dimension_semantics = [#tpu.dimension_semantics<parallel>], iteration_bounds = array<i64: 1>, scalar_prefetch = 0 : i64, scratch_operands = 0 : i64, tpu.core_type = #tpu.core_type<tc>, window_params = [{transform_indices = @transform_0, window_bounds = array<i64: 5, 512>}, {pipeline_mode = #tpu.pipeline_mode<synchronous>, transform_indices = @transform_1, window_bounds = array<i64: 104, 128>}, {pipeline_mode = #tpu.pipeline_mode<synchronous>, transform_indices = @transform_2, window_bounds = array<i64: 48, 128>}, {transform_indices = @transform_3, window_bounds = array<i64: 2, 512>}]} {
    %c0 = arith.constant 0 : index
    %c0_0 = arith.constant 0 : index
    %0 = vector.load %arg1[%c0, %c0_0] : memref<5x512xf32, #tpu.memory_space<vmem>>, vector<5x512xf32>
    %c0_1 = arith.constant 0 : index
    %c0_2 = arith.constant 0 : index
    %1 = vector.load %arg2[%c0_1, %c0_2] : memref<104x128xf32, #tpu.memory_space<vmem>>, vector<32x5xf32>
    %c32 = arith.constant 32 : index
    %c0_3 = arith.constant 0 : index
    %2 = vector.load %arg2[%c32, %c0_3] : memref<104x128xf32, #tpu.memory_space<vmem>>, vector<32x1xf32>
    %3 = vector.extract_strided_slice %1 {offsets = [0, 0], sizes = [32, 1], strides = [1, 1]} : vector<32x5xf32> to vector<32x1xf32>
    %4 = vector.extract_strided_slice %0 {offsets = [0, 0], sizes = [1, 512], strides = [1, 1]} : vector<5x512xf32> to vector<1x512xf32>
    %5 = vector.broadcast %3 : vector<32x1xf32> to vector<32x512xf32>
    %6 = vector.broadcast %4 : vector<1x512xf32> to vector<32x512xf32>
    %7 = arith.mulf %5, %6 : vector<32x512xf32>
    %8 = vector.broadcast %2 : vector<32x1xf32> to vector<32x512xf32>
    %9 = arith.addf %8, %7 : vector<32x512xf32>
    %10 = vector.extract_strided_slice %1 {offsets = [0, 1], sizes = [32, 1], strides = [1, 1]} : vector<32x5xf32> to vector<32x1xf32>
    %11 = vector.extract_strided_slice %0 {offsets = [1, 0], sizes = [1, 512], strides = [1, 1]} : vector<5x512xf32> to vector<1x512xf32>
    %12 = vector.broadcast %10 : vector<32x1xf32> to vector<32x512xf32>
    %13 = vector.broadcast %11 : vector<1x512xf32> to vector<32x512xf32>
    %14 = arith.mulf %12, %13 : vector<32x512xf32>
    %15 = arith.addf %9, %14 : vector<32x512xf32>
    %16 = vector.extract_strided_slice %1 {offsets = [0, 2], sizes = [32, 1], strides = [1, 1]} : vector<32x5xf32> to vector<32x1xf32>
    %17 = vector.extract_strided_slice %0 {offsets = [2, 0], sizes = [1, 512], strides = [1, 1]} : vector<5x512xf32> to vector<1x512xf32>
    %18 = vector.broadcast %16 : vector<32x1xf32> to vector<32x512xf32>
    %19 = vector.broadcast %17 : vector<1x512xf32> to vector<32x512xf32>
    %20 = arith.mulf %18, %19 : vector<32x512xf32>
    %21 = arith.addf %15, %20 : vector<32x512xf32>
    %22 = vector.extract_strided_slice %1 {offsets = [0, 3], sizes = [32, 1], strides = [1, 1]} : vector<32x5xf32> to vector<32x1xf32>
    %23 = vector.extract_strided_slice %0 {offsets = [3, 0], sizes = [1, 512], strides = [1, 1]} : vector<5x512xf32> to vector<1x512xf32>
    %24 = vector.broadcast %22 : vector<32x1xf32> to vector<32x512xf32>
    %25 = vector.broadcast %23 : vector<1x512xf32> to vector<32x512xf32>
    %26 = arith.mulf %24, %25 : vector<32x512xf32>
    %27 = arith.addf %21, %26 : vector<32x512xf32>
    %28 = vector.extract_strided_slice %1 {offsets = [0, 4], sizes = [32, 1], strides = [1, 1]} : vector<32x5xf32> to vector<32x1xf32>
    %29 = vector.extract_strided_slice %0 {offsets = [4, 0], sizes = [1, 512], strides = [1, 1]} : vector<5x512xf32> to vector<1x512xf32>
    %30 = vector.broadcast %28 : vector<32x1xf32> to vector<32x512xf32>
    %31 = vector.broadcast %29 : vector<1x512xf32> to vector<32x512xf32>
    %32 = arith.mulf %30, %31 : vector<32x512xf32>
    %33 = arith.addf %27, %32 : vector<32x512xf32>
    %cst = arith.constant 0.000000e+00 : f32
    %34 = vector.broadcast %cst : f32 to vector<32x512xf32>
    %35 = arith.maximumf %33, %34 : vector<32x512xf32>
    %c0_4 = arith.constant 0 : index
    %c0_5 = arith.constant 0 : index
    %36 = vector.load %arg3[%c0_4, %c0_5] : memref<48x128xbf16, #tpu.memory_space<vmem>>, vector<32x32xbf16>
    %c64 = arith.constant 64 : index
    %c0_6 = arith.constant 0 : index
    %37 = vector.load %arg2[%c64, %c0_6] : memref<104x128xf32, #tpu.memory_space<vmem>>, vector<32x1xf32>
    %38 = arith.truncf %35 : vector<32x512xf32> to vector<32x512xbf16>
    %cst_7 = arith.constant dense<0.000000e+00> : vector<32x512xf32>
    %39 = tpu.matmul %36, %38, %cst_7 {dimension_numbers = #tpu.dot_dimension_numbers<[1], [0], [0], [1], [0, 0, 1, 1], [], []>} : vector<32x32xbf16>, vector<32x512xbf16>, vector<32x512xf32> -> vector<32x512xf32>
    %40 = vector.broadcast %37 : vector<32x1xf32> to vector<32x512xf32>
    %41 = arith.addf %39, %40 : vector<32x512xf32>
    %cst_8 = arith.constant 0.000000e+00 : f32
    %42 = vector.broadcast %cst_8 : f32 to vector<32x512xf32>
    %43 = arith.maximumf %41, %42 : vector<32x512xf32>
    %c32_9 = arith.constant 32 : index
    %c0_10 = arith.constant 0 : index
    %44 = vector.load %arg3[%c32_9, %c0_10] : memref<48x128xbf16, #tpu.memory_space<vmem>>, vector<16x32xbf16>
    %c96 = arith.constant 96 : index
    %c0_11 = arith.constant 0 : index
    %45 = vector.load %arg2[%c96, %c0_11] : memref<104x128xf32, #tpu.memory_space<vmem>>, vector<2x1xf32>
    %46 = arith.truncf %43 : vector<32x512xf32> to vector<32x512xbf16>
    %cst_12 = arith.constant dense<0.000000e+00> : vector<16x512xf32>
    %47 = tpu.matmul %44, %46, %cst_12 {dimension_numbers = #tpu.dot_dimension_numbers<[1], [0], [0], [1], [0, 0, 1, 1], [], []>} : vector<16x32xbf16>, vector<32x512xbf16>, vector<16x512xf32> -> vector<16x512xf32>
    %48 = vector.extract_strided_slice %47 {offsets = [0, 0], sizes = [2, 512], strides = [1, 1]} : vector<16x512xf32> to vector<2x512xf32>
    %49 = vector.broadcast %45 : vector<2x1xf32> to vector<2x512xf32>
    %50 = arith.addf %48, %49 : vector<2x512xf32>
    %51 = math.tanh %50 : vector<2x512xf32>
    %c0_13 = arith.constant 0 : index
    %c0_14 = arith.constant 0 : index
    %52 = vector.load %arg4[%c0_13, %c0_14] : memref<2x512xf32, #tpu.memory_space<vmem>>, vector<2x512xf32>
    tpu.vector_store %arg4[%c0_13, %c0_14], %51 {strides = array<i32>} : memref<2x512xf32, #tpu.memory_space<vmem>>, vector<2x512xf32>,
    return
  }
  func.func @transform_0(%arg0: i32) -> (i32, i32) {
    %c0_i32 = arith.constant 0 : i32
    %c0_i32_0 = arith.constant 0 : i32
    return %c0_i32, %arg0 : i32, i32
  }
  func.func @transform_1(%arg0: i32) -> (i32, i32) {
    %c0_i32 = arith.constant 0 : i32
    %c0_i32_0 = arith.constant 0 : i32
    %c0_i32_1 = arith.constant 0 : i32
    return %c0_i32, %c0_i32_0 : i32, i32
  }
  func.func @transform_2(%arg0: i32) -> (i32, i32) {
    %c0_i32 = arith.constant 0 : i32
    %c0_i32_0 = arith.constant 0 : i32
    %c0_i32_1 = arith.constant 0 : i32
    return %c0_i32, %c0_i32_0 : i32, i32
  }
  func.func @transform_3(%arg0: i32) -> (i32, i32) {
    %c0_i32 = arith.constant 0 : i32
    %c0_i32_0 = arith.constant 0 : i32
    return %c0_i32, %arg0 : i32, i32
  }
}

</mosaic_0001>

<llo_original>
// kernel: tpu_custom_call.1
$region0: #{tpu_custom_call.1}
  #allocation0 [shape = 'u32[]', space=smem, size = 0x4, offset = 0x4, fixed_abs, tag = 'smem constant byte address 0x4 - core index']
  #allocation1 [shape = 'u32[144,128]{1,0:T(1,128)}', space=vmem, size = 0x12000, scoped, tag = 'internal scratch']
  %s0 = inlined_call_operand.hbm [shape: f32[5,512], index: 0, kind: input, shape index: {}]
  %s1 = inlined_call_operand.hbm [shape: f32[104,128], index: 1, kind: input, shape index: {}]
  %s2 = inlined_call_operand.hbm [shape: bf16[48,128], index: 2, kind: input, shape index: {}]
  %s3 = inlined_call_operand.hbm [shape: f32[2,512], index: 3, kind: output, shape index: {}]
  %s4 = sld [smem:[#allocation0]]
  $region34: #{tpu_custom_call.1} parent=0
    _
  %s6 = ssub.s32 1, %s4
  %s7 = scalar_select 0, %s6, %s4
  $region1: #{tpu_custom_call.1} parent=0
    #allocation2 [shape = 'u8[16384]{0}', space=vmem, size = 0x4000, scoped, tag = 'input window, operand 0, single buffered']
    #allocation3 [shape = 's32[1]{0}', space=sflag, size = 0x4, scoped, tag = 'scoped memory for tpu_custom_call.1']
    #allocation4 [shape = 's32[1]{0}', space=sflag, size = 0x4, scoped, tag = 'scoped memory for tpu_custom_call.1']
    #allocation5 [shape = 'u8[53248]{0}', space=vmem, size = 0xd000, scoped, tag = 'input window, operand 1, single buffered']
    #allocation6 [shape = 's32[1]{0}', space=sflag, size = 0x4, scoped, tag = 'scoped memory for tpu_custom_call.1']
    #allocation7 [shape = 'u8[12288]{0}', space=vmem, size = 0x3000, scoped, tag = 'input window, operand 2, single buffered']
    #allocation8 [shape = 'u8[4096]{0}', space=vmem, size = 0x1000, scoped, tag = 'output window, operand 0, single buffered']
    %8 = vsyncpa [#allocation3], 0
    %9 = vsyncpa [#allocation6], 0
    %10 = vsyncpa [#allocation4], 0
    // Predicated region
    $region2: #{tpu_custom_call.1} parent=1 // pred_check
      _
    $region3: #{tpu_custom_call.1} parent=1 // pred_check_branch
      %12 = sbr.rel (0) target = $region5
    $region4: #{tpu_custom_call.1} parent=1 // pred_region
      %s14 = ssub.s32 512, 512
      %15 = vsyncadd [#allocation3], %s14
      %s17 = sshll.u32 [#allocation2], 4
      %s18 = int_to_ptr.vmem [resolvable:$true] %s17
      %20 = dma.hbm_to_vmem [thread:$0]  %s0, 512, %s18, [#allocation3]
    $region5: #{tpu_custom_call.1} parent=1 // pred_fallthru
      _
    // Predicated region
    $region6: #{tpu_custom_call.1} parent=1 // pred_check
      _
    $region7: #{tpu_custom_call.1} parent=1 // pred_check_branch
      %22 = sbr.rel (0) target = $region9
    $region8: #{tpu_custom_call.1} parent=1 // pred_region
      %s24 = ssub.s32 1664, 1664
      %25 = vsyncadd [#allocation6], %s24
      %s26 = sshll.u32 [#allocation5], 4
      %s27 = int_to_ptr.vmem [resolvable:$true] %s26
      %32 = dma.hbm_to_vmem [thread:$0]  %s1, 1664, %s27, [#allocation6], 128, 128, 8
    $region9: #{tpu_custom_call.1} parent=1 // pred_fallthru
      _
    // Predicated region
    $region10: #{tpu_custom_call.1} parent=1 // pred_check
      _
    $region11: #{tpu_custom_call.1} parent=1 // pred_check_branch
      %34 = sbr.rel (0) target = $region13
    $region12: #{tpu_custom_call.1} parent=1 // pred_region
      %s36 = ssub.s32 384, 384
      %37 = vsyncadd [#allocation6], %s36
      %s38 = sshll.u32 [#allocation7], 4
      %s39 = int_to_ptr.vmem [resolvable:$true] %s38
      %44 = dma.hbm_to_vmem [thread:$0]  %s2, 384, %s39, [#allocation6], 64, 64, 4
    $region13: #{tpu_custom_call.1} parent=1 // pred_fallthru
      _
    // Predicated region
    $region14: #{tpu_custom_call.1} parent=1 // pred_check
      _
    $region15: #{tpu_custom_call.1} parent=1 // pred_check_branch
      %46 = sbr.rel (0) target = $region17
    $region16: #{tpu_custom_call.1} parent=1 // pred_region
      %47 = dma.done [#allocation3], 512
    $region17: #{tpu_custom_call.1} parent=1 // pred_fallthru
      _
    // Predicated region
    $region18: #{tpu_custom_call.1} parent=1 // pred_check
      _
    $region19: #{tpu_custom_call.1} parent=1 // pred_check_branch
      %49 = sbr.rel (0) target = $region21
    $region20: #{tpu_custom_call.1} parent=1 // pred_region
      %50 = dma.done [#allocation6], 1664
    $region21: #{tpu_custom_call.1} parent=1 // pred_fallthru
      _
    // Predicated region
    $region22: #{tpu_custom_call.1} parent=1 // pred_check
      _
    $region23: #{tpu_custom_call.1} parent=1 // pred_check_branch
      %52 = sbr.rel (0) target = $region25
    $region24: #{tpu_custom_call.1} parent=1 // pred_region
      %53 = dma.done [#allocation6], 384
    $region25: #{tpu_custom_call.1} parent=1 // pred_fallthru
      _
    %v55 = vld [vmem:[#allocation2] sm:$0x1f]
    %v56 = vld [vmem:[#allocation2 + $0x8] sm:$0x1f]
    %v57 = vld [vmem:[#allocation2 + $0x10] sm:$0x1f]
    %v58 = vld [vmem:[#allocation2 + $0x18] sm:$0x1f]
    %v59 = vld [vmem:[#allocation5] sm:$0xff]
    %v60 = vld [vmem:[#allocation5 + $0x8] sm:$0xff]
    %v61 = vld [vmem:[#allocation5 + $0x10] sm:$0xff]
    %v62 = vld [vmem:[#allocation5 + $0x18] sm:$0xff]
    %v63 = vld [vmem:[#allocation5 + $0x20] sm:$0xff]
    %v64 = vld [vmem:[#allocation5 + $0x28] sm:$0xff]
    %v65 = vld [vmem:[#allocation5 + $0x30] sm:$0xff]
    %v66 = vld [vmem:[#allocation5 + $0x38] sm:$0xff]
    %68 = vset.pattern.permute.xlu0 0
    %69 = vperm.xlu0 %68, %v59
    %v70 = vpop.permute.xlu0 %69
    %73 = vset.pattern.permute.xlu0 0
    %74 = vperm.xlu0 %73, %v60
    %v75 = vpop.permute.xlu0 %74
    %78 = vset.pattern.permute.xlu0 0
    %79 = vperm.xlu0 %78, %v61
    %v80 = vpop.permute.xlu0 %79
    %83 = vset.pattern.permute.xlu0 0
    %84 = vperm.xlu0 %83, %v62
    %v85 = vpop.permute.xlu0 %84
    %v87 = vlaneseq
    %v88 = vshrl.u32 %v87, 7
    %v89 = vsub.s32 0, %v88
    %v90 = vrot.slane %v55, %v89
    %v91 = vlaneseq
    %v92 = vshrl.u32 %v91, 7
    %v93 = vsub.s32 0, %v92
    %v94 = vrot.slane %v56, %v93
    %v95 = vlaneseq
    %v96 = vshrl.u32 %v95, 7
    %v97 = vsub.s32 0, %v96
    %v98 = vrot.slane %v57, %v97
    %v99 = vlaneseq
    %v100 = vshrl.u32 %v99, 7
    %v101 = vsub.s32 0, %v100
    %v102 = vrot.slane %v58, %v101
    %v103 = vmul.f32 %v70, %v90
    %v104 = vmul.f32 %v70, %v94
    %v105 = vmul.f32 %v70, %v98
    %v106 = vmul.f32 %v70, %v102
    %v107 = vmul.f32 %v75, %v90
    %v108 = vmul.f32 %v75, %v94
    %v109 = vmul.f32 %v75, %v98
    %v110 = vmul.f32 %v75, %v102
    %v111 = vmul.f32 %v80, %v90
    %v112 = vmul.f32 %v80, %v94
    %v113 = vmul.f32 %v80, %v98
    %v114 = vmul.f32 %v80, %v102
    %v115 = vmul.f32 %v85, %v90
    %v116 = vmul.f32 %v85, %v94
    %v117 = vmul.f32 %v85, %v98
    %v118 = vmul.f32 %v85, %v102
    %120 = vset.pattern.permute.xlu0 0
    %121 = vperm.xlu0 %120, %v63
    %v122 = vpop.permute.xlu0 %121
    %125 = vset.pattern.permute.xlu0 0
    %126 = vperm.xlu0 %125, %v64
    %v127 = vpop.permute.xlu0 %126
    %130 = vset.pattern.permute.xlu0 0
    %131 = vperm.xlu0 %130, %v65
    %v132 = vpop.permute.xlu0 %131
    %135 = vset.pattern.permute.xlu0 0
    %136 = vperm.xlu0 %135, %v66
    %v137 = vpop.permute.xlu0 %136
    %v139 = vadd.f32 %v122, %v103
    %v140 = vadd.f32 %v122, %v104
    %v141 = vadd.f32 %v122, %v105
    %v142 = vadd.f32 %v122, %v106
    %v143 = vadd.f32 %v127, %v107
    %v144 = vadd.f32 %v127, %v108
    %v145 = vadd.f32 %v127, %v109
    %v146 = vadd.f32 %v127, %v110
    %v147 = vadd.f32 %v132, %v111
    %v148 = vadd.f32 %v132, %v112
    %v149 = vadd.f32 %v132, %v113
    %v150 = vadd.f32 %v132, %v114
    %v151 = vadd.f32 %v137, %v115
    %v152 = vadd.f32 %v137, %v116
    %v153 = vadd.f32 %v137, %v117
    %v154 = vadd.f32 %v137, %v118
    %155 = vset.pattern.permute.xlu0 1
    %156 = vperm.xlu0 %155, %v59
    %v157 = vpop.permute.xlu0 %156
    %159 = vset.pattern.permute.xlu0 1
    %160 = vperm.xlu0 %159, %v60
    %v161 = vpop.permute.xlu0 %160
    %163 = vset.pattern.permute.xlu0 1
    %164 = vperm.xlu0 %163, %v61
    %v165 = vpop.permute.xlu0 %164
    %167 = vset.pattern.permute.xlu0 1
    %168 = vperm.xlu0 %167, %v62
    %v169 = vpop.permute.xlu0 %168
    %v171 = vlaneseq
    %v172 = vshrl.u32 %v171, 7
    %v173 = vsub.s32 1, %v172
    %v174 = vrot.slane %v55, %v173
    %v175 = vlaneseq
    %v176 = vshrl.u32 %v175, 7
    %v177 = vsub.s32 1, %v176
    %v178 = vrot.slane %v56, %v177
    %v179 = vlaneseq
    %v180 = vshrl.u32 %v179, 7
    %v181 = vsub.s32 1, %v180
    %v182 = vrot.slane %v57, %v181
    %v183 = vlaneseq
    %v184 = vshrl.u32 %v183, 7
    %v185 = vsub.s32 1, %v184
    %v186 = vrot.slane %v58, %v185
    %v187 = vmul.f32 %v157, %v174
    %v188 = vmul.f32 %v157, %v178
    %v189 = vmul.f32 %v157, %v182
    %v190 = vmul.f32 %v157, %v186
    %v191 = vmul.f32 %v161, %v174
    %v192 = vmul.f32 %v161, %v178
    %v193 = vmul.f32 %v161, %v182
    %v194 = vmul.f32 %v161, %v186
    %v195 = vmul.f32 %v165, %v174
    %v196 = vmul.f32 %v165, %v178
    %v197 = vmul.f32 %v165, %v182
    %v198 = vmul.f32 %v165, %v186
    %v199 = vmul.f32 %v169, %v174
    %v200 = vmul.f32 %v169, %v178
    %v201 = vmul.f32 %v169, %v182
    %v202 = vmul.f32 %v169, %v186
    %v203 = vadd.f32 %v139, %v187
    %v204 = vadd.f32 %v140, %v188
    %v205 = vadd.f32 %v141, %v189
    %v206 = vadd.f32 %v142, %v190
    %v207 = vadd.f32 %v143, %v191
    %v208 = vadd.f32 %v144, %v192
    %v209 = vadd.f32 %v145, %v193
    %v210 = vadd.f32 %v146, %v194
    %v211 = vadd.f32 %v147, %v195
    %v212 = vadd.f32 %v148, %v196
    %v213 = vadd.f32 %v149, %v197
    %v214 = vadd.f32 %v150, %v198
    %v215 = vadd.f32 %v151, %v199
    %v216 = vadd.f32 %v152, %v200
    %v217 = vadd.f32 %v153, %v201
    %v218 = vadd.f32 %v154, %v202
    %219 = vset.pattern.permute.xlu0 2
    %220 = vperm.xlu0 %219, %v59
    %v221 = vpop.permute.xlu0 %220
    %223 = vset.pattern.permute.xlu0 2
    %224 = vperm.xlu0 %223, %v60
    %v225 = vpop.permute.xlu0 %224
    %227 = vset.pattern.permute.xlu0 2
    %228 = vperm.xlu0 %227, %v61
    %v229 = vpop.permute.xlu0 %228
    %231 = vset.pattern.permute.xlu0 2
    %232 = vperm.xlu0 %231, %v62
    %v233 = vpop.permute.xlu0 %232
    %v235 = vlaneseq
    %v236 = vshrl.u32 %v235, 7
    %v237 = vsub.s32 2, %v236
    %v238 = vrot.slane %v55, %v237
    %v239 = vlaneseq
    %v240 = vshrl.u32 %v239, 7
    %v241 = vsub.s32 2, %v240
    %v242 = vrot.slane %v56, %v241
    %v243 = vlaneseq
    %v244 = vshrl.u32 %v243, 7
    %v245 = vsub.s32 2, %v244
    %v246 = vrot.slane %v57, %v245
    %v247 = vlaneseq
    %v248 = vshrl.u32 %v247, 7
    %v249 = vsub.s32 2, %v248
    %v250 = vrot.slane %v58, %v249
    %v251 = vmul.f32 %v221, %v238
    %v252 = vmul.f32 %v221, %v242
    %v253 = vmul.f32 %v221, %v246
    %v254 = vmul.f32 %v221, %v250
    %v255 = vmul.f32 %v225, %v238
    %v256 = vmul.f32 %v225, %v242
    %v257 = vmul.f32 %v225, %v246
    %v258 = vmul.f32 %v225, %v250
    %v259 = vmul.f32 %v229, %v238
    %v260 = vmul.f32 %v229, %v242
    %v261 = vmul.f32 %v229, %v246
    %v262 = vmul.f32 %v229, %v250
    %v263 = vmul.f32 %v233, %v238
    %v264 = vmul.f32 %v233, %v242
    %v265 = vmul.f32 %v233, %v246
    %v266 = vmul.f32 %v233, %v250
    %v267 = vadd.f32 %v203, %v251
    %v268 = vadd.f32 %v204, %v252
    %v269 = vadd.f32 %v205, %v253
    %v270 = vadd.f32 %v206, %v254
    %v271 = vadd.f32 %v207, %v255
    %v272 = vadd.f32 %v208, %v256
    %v273 = vadd.f32 %v209, %v257
    %v274 = vadd.f32 %v210, %v258
    %v275 = vadd.f32 %v211, %v259
    %v276 = vadd.f32 %v212, %v260
    %v277 = vadd.f32 %v213, %v261
    %v278 = vadd.f32 %v214, %v262
    %v279 = vadd.f32 %v215, %v263
    %v280 = vadd.f32 %v216, %v264
    %v281 = vadd.f32 %v217, %v265
    %v282 = vadd.f32 %v218, %v266
    %283 = vset.pattern.permute.xlu0 3
    %284 = vperm.xlu0 %283, %v59
    %v285 = vpop.permute.xlu0 %284
    %287 = vset.pattern.permute.xlu0 3
    %288 = vperm.xlu0 %287, %v60
    %v289 = vpop.permute.xlu0 %288
    %291 = vset.pattern.permute.xlu0 3
    %292 = vperm.xlu0 %291, %v61
    %v293 = vpop.permute.xlu0 %292
    %295 = vset.pattern.permute.xlu0 3
    %296 = vperm.xlu0 %295, %v62
    %v297 = vpop.permute.xlu0 %296
    %v299 = vlaneseq
    %v300 = vshrl.u32 %v299, 7
    %v301 = vsub.s32 3, %v300
    %v302 = vrot.slane %v55, %v301
    %v303 = vlaneseq
    %v304 = vshrl.u32 %v303, 7
    %v305 = vsub.s32 3, %v304
    %v306 = vrot.slane %v56, %v305
    %v307 = vlaneseq
    %v308 = vshrl.u32 %v307, 7
    %v309 = vsub.s32 3, %v308
    %v310 = vrot.slane %v57, %v309
    %v311 = vlaneseq
    %v312 = vshrl.u32 %v311, 7
    %v313 = vsub.s32 3, %v312
    %v314 = vrot.slane %v58, %v313
    %v315 = vmul.f32 %v285, %v302
    %v316 = vmul.f32 %v285, %v306
    %v317 = vmul.f32 %v285, %v310
    %v318 = vmul.f32 %v285, %v314
    %v319 = vmul.f32 %v289, %v302
    %v320 = vmul.f32 %v289, %v306
    %v321 = vmul.f32 %v289, %v310
    %v322 = vmul.f32 %v289, %v314
    %v323 = vmul.f32 %v293, %v302
    %v324 = vmul.f32 %v293, %v306
    %v325 = vmul.f32 %v293, %v310
    %v326 = vmul.f32 %v293, %v314
    %v327 = vmul.f32 %v297, %v302
    %v328 = vmul.f32 %v297, %v306
    %v329 = vmul.f32 %v297, %v310
    %v330 = vmul.f32 %v297, %v314
    %v331 = vadd.f32 %v267, %v315
    %v332 = vadd.f32 %v268, %v316
    %v333 = vadd.f32 %v269, %v317
    %v334 = vadd.f32 %v270, %v318
    %v335 = vadd.f32 %v271, %v319
    %v336 = vadd.f32 %v272, %v320
    %v337 = vadd.f32 %v273, %v321
    %v338 = vadd.f32 %v274, %v322
    %v339 = vadd.f32 %v275, %v323
    %v340 = vadd.f32 %v276, %v324
    %v341 = vadd.f32 %v277, %v325
    %v342 = vadd.f32 %v278, %v326
    %v343 = vadd.f32 %v279, %v327
    %v344 = vadd.f32 %v280, %v328
    %v345 = vadd.f32 %v281, %v329
    %v346 = vadd.f32 %v282, %v330
    %347 = vset.pattern.permute.xlu0 4
    %348 = vperm.xlu0 %347, %v59
    %v349 = vpop.permute.xlu0 %348
    %351 = vset.pattern.permute.xlu0 4
    %352 = vperm.xlu0 %351, %v60
    %v353 = vpop.permute.xlu0 %352
    %355 = vset.pattern.permute.xlu0 4
    %356 = vperm.xlu0 %355, %v61
    %v357 = vpop.permute.xlu0 %356
    %359 = vset.pattern.permute.xlu0 4
    %360 = vperm.xlu0 %359, %v62
    %v361 = vpop.permute.xlu0 %360
    %v363 = vlaneseq
    %v364 = vshrl.u32 %v363, 7
    %v365 = vsub.s32 4, %v364
    %v366 = vrot.slane %v55, %v365
    %v367 = vlaneseq
    %v368 = vshrl.u32 %v367, 7
    %v369 = vsub.s32 4, %v368
    %v370 = vrot.slane %v56, %v369
    %v371 = vlaneseq
    %v372 = vshrl.u32 %v371, 7
    %v373 = vsub.s32 4, %v372
    %v374 = vrot.slane %v57, %v373
    %v375 = vlaneseq
    %v376 = vshrl.u32 %v375, 7
    %v377 = vsub.s32 4, %v376
    %v378 = vrot.slane %v58, %v377
    %v379 = vmul.f32 %v349, %v366
    %v380 = vmul.f32 %v349, %v370
    %v381 = vmul.f32 %v349, %v374
    %v382 = vmul.f32 %v349, %v378
    %v383 = vmul.f32 %v353, %v366
    %v384 = vmul.f32 %v353, %v370
    %v385 = vmul.f32 %v353, %v374
    %v386 = vmul.f32 %v353, %v378
    %v387 = vmul.f32 %v357, %v366
    %v388 = vmul.f32 %v357, %v370
    %v389 = vmul.f32 %v357, %v374
    %v390 = vmul.f32 %v357, %v378
    %v391 = vmul.f32 %v361, %v366
    %v392 = vmul.f32 %v361, %v370
    %v393 = vmul.f32 %v361, %v374
    %v394 = vmul.f32 %v361, %v378
    %v395 = vadd.f32 %v331, %v379
    %v396 = vadd.f32 %v332, %v380
    %v397 = vadd.f32 %v333, %v381
    %v398 = vadd.f32 %v334, %v382
    %v399 = vadd.f32 %v335, %v383
    %v400 = vadd.f32 %v336, %v384
    %v401 = vadd.f32 %v337, %v385
    %v402 = vadd.f32 %v338, %v386
    %v403 = vadd.f32 %v339, %v387
    %v404 = vadd.f32 %v340, %v388
    %v405 = vadd.f32 %v341, %v389
    %v406 = vadd.f32 %v342, %v390
    %v407 = vadd.f32 %v343, %v391
    %v408 = vadd.f32 %v344, %v392
    %v409 = vadd.f32 %v345, %v393
    %v410 = vadd.f32 %v346, %v394
    %v411 = vmax.f32 %v395, 0.0
    %v412 = vmax.f32 %v396, 0.0
    %v413 = vmax.f32 %v397, 0.0
    %v414 = vmax.f32 %v398, 0.0
    %v415 = vmax.f32 %v399, 0.0
    %v416 = vmax.f32 %v400, 0.0
    %v417 = vmax.f32 %v401, 0.0
    %v418 = vmax.f32 %v402, 0.0
    %v419 = vmax.f32 %v403, 0.0
    %v420 = vmax.f32 %v404, 0.0
    %v421 = vmax.f32 %v405, 0.0
    %v422 = vmax.f32 %v406, 0.0
    %v423 = vmax.f32 %v407, 0.0
    %v424 = vmax.f32 %v408, 0.0
    %v425 = vmax.f32 %v409, 0.0
    %v426 = vmax.f32 %v410, 0.0
    %v427 = vld [vmem:[#allocation7] sm:$0xf]
    %v428 = vld [vmem:[#allocation7 + $0x4] sm:$0xf]
    %v429 = vld [vmem:[#allocation7 + $0x8] sm:$0xf]
    %v430 = vld [vmem:[#allocation7 + $0xc] sm:$0xf]
    %v431 = vld [vmem:[#allocation5 + $0x40] sm:$0xff]
    %v432 = vld [vmem:[#allocation5 + $0x48] sm:$0xff]
    %v433 = vld [vmem:[#allocation5 + $0x50] sm:$0xff]
    %v434 = vld [vmem:[#allocation5 + $0x58] sm:$0xff]
    %v435 = vpack.c.bf16 %v415, %v411
    %v436 = vpack.c.bf16 %v416, %v412
    %v437 = vpack.c.bf16 %v417, %v413
    %v438 = vpack.c.bf16 %v418, %v414
    %v439 = vpack.c.bf16 %v423, %v419
    %v440 = vpack.c.bf16 %v424, %v420
    %v441 = vpack.c.bf16 %v425, %v421
    %v442 = vpack.c.bf16 %v426, %v422
    %444 = vset.pattern.permute.xlu0 0
    %445 = vperm.xlu0 %444, %v431
    %v446 = vpop.permute.xlu0 %445
    %449 = vset.pattern.permute.xlu0 0
    %450 = vperm.xlu0 %449, %v432
    %v451 = vpop.permute.xlu0 %450
    %454 = vset.pattern.permute.xlu0 0
    %455 = vperm.xlu0 %454, %v433
    %v456 = vpop.permute.xlu0 %455
    %459 = vset.pattern.permute.xlu0 0
    %460 = vperm.xlu0 %459, %v434
    %v461 = vpop.permute.xlu0 %460
    %v467 = vunpack.c.l.b16 %v427
    %v468 = vunpack.c.l.b16 %v428
    %v469 = vunpack.c.l.b16 %v429
    %v470 = vunpack.c.l.b16 %v430
    %v471 = vpack.c.b16 %v468, %v467
    %v472 = vpack.c.b16 %v470, %v469
    %vm473 = vcmask 261120
    %v475 = vsel %vm473, %v471, 0
    %v478 = vsel %vm473, %v472, 0
    %480 = vmatprep.subr.bf16.mxu0 %v436
    %481 = vmatpush1.bf16.msra.mxu0 %v435
    %482 = vmatprep.subr.bf16.mxu0 %v440
    %483 = vmatpush1.bf16.msra.mxu0 %v439
    %484 = vmatprep.subr.bf16.mxu0 0
    %485 = vmatpush1.bf16.msra.mxu0 0
    %486 = vmatprep.subr.bf16.mxu0 0
    %487 = vmatpush1.bf16.msra.mxu0 0
    %488 = vmatprep.subr.bf16.mxu0 0
    %489 = vmatpush1.bf16.msra.mxu0 0
    %490 = vmatprep.subr.bf16.mxu0 0
    %491 = vmatpush1.bf16.msra.mxu0 0
    %492 = vmatprep.subr.bf16.mxu0 0
    %493 = vmatpush1.bf16.msra.mxu0 0
    %494 = vmatprep.subr.bf16.mxu0 0
    %495 = vmatpush1.bf16.msra.mxu0 0
    %496 = vmatprep.subr.bf16.mxu0 0
    %497 = vmatpush1.bf16.msra.mxu0 0
    %498 = vmatprep.subr.bf16.mxu0 0
    %499 = vmatpush1.bf16.msra.mxu0 0
    %500 = vmatprep.subr.bf16.mxu0 0
    %501 = vmatpush1.bf16.msra.mxu0 0
    %502 = vmatprep.subr.bf16.mxu0 0
    %503 = vmatpush1.bf16.msra.mxu0 0
    %504 = vmatprep.subr.bf16.mxu0 0
    %505 = vmatpush1.bf16.msra.mxu0 0
    %506 = vmatprep.subr.bf16.mxu0 0
    %507 = vmatpush1.bf16.msra.mxu0 0
    %508 = vmatprep.subr.bf16.mxu0 0
    %509 = vmatpush1.bf16.msra.mxu0 0
    %510 = vmatprep.subr.bf16.mxu0 0
    %511 = vmatpush1.bf16.msra.mxu0 0
    %512 = vmatprep.mubr.bf16.mxu0 0
    %513 = vmatmul.mubr.bf16.gmra.mrb[0].mxu0 %v475
    %v514 = vpop.f32.mrb[0].mxu0
    %v515 = vadd.f32 %v446, %v514
    %v516 = vpop.f32.mrb[0].mxu0
    %v517 = vadd.f32 %v446, %v516
    %v518 = vpop.f32.mrb[0].mxu0
    %v519 = vadd.f32 %v451, %v518
    %v520 = vpop.f32.mrb[0].mxu0
    %v521 = vadd.f32 %v451, %v520
    %522 = vmatprep.mubr.bf16.mxu0 0
    %523 = vmatmul.mubr.bf16.gmra.mrb[0].mxu0 %v478
    %v524 = vpop.f32.mrb[0].mxu0
    %v525 = vadd.f32 %v456, %v524
    %v526 = vpop.f32.mrb[0].mxu0
    %v527 = vadd.f32 %v456, %v526
    %v528 = vpop.f32.mrb[0].mxu0
    %v529 = vadd.f32 %v461, %v528
    %v530 = vpop.f32.mrb[0].mxu0
    %v531 = vadd.f32 %v461, %v530
    %532 = vdwg.mxu0
    %533 = vmatprep.subr.bf16.mxu0 %v438
    %534 = vmatpush1.bf16.msra.mxu0 %v437
    %535 = vmatprep.subr.bf16.mxu0 %v442
    %536 = vmatpush1.bf16.msra.mxu0 %v441
    %537 = vmatprep.subr.bf16.mxu0 0
    %538 = vmatpush1.bf16.msra.mxu0 0
    %539 = vmatprep.subr.bf16.mxu0 0
    %540 = vmatpush1.bf16.msra.mxu0 0
    %541 = vmatprep.subr.bf16.mxu0 0
    %542 = vmatpush1.bf16.msra.mxu0 0
    %543 = vmatprep.subr.bf16.mxu0 0
    %544 = vmatpush1.bf16.msra.mxu0 0
    %545 = vmatprep.subr.bf16.mxu0 0
    %546 = vmatpush1.bf16.msra.mxu0 0
    %547 = vmatprep.subr.bf16.mxu0 0
    %548 = vmatpush1.bf16.msra.mxu0 0
    %549 = vmatprep.subr.bf16.mxu0 0
    %550 = vmatpush1.bf16.msra.mxu0 0
    %551 = vmatprep.subr.bf16.mxu0 0
    %552 = vmatpush1.bf16.msra.mxu0 0
    %553 = vmatprep.subr.bf16.mxu0 0
    %554 = vmatpush1.bf16.msra.mxu0 0
    %555 = vmatprep.subr.bf16.mxu0 0
    %556 = vmatpush1.bf16.msra.mxu0 0
    %557 = vmatprep.subr.bf16.mxu0 0
    %558 = vmatpush1.bf16.msra.mxu0 0
    %559 = vmatprep.subr.bf16.mxu0 0
    %560 = vmatpush1.bf16.msra.mxu0 0
    %561 = vmatprep.subr.bf16.mxu0 0
    %562 = vmatpush1.bf16.msra.mxu0 0
    %563 = vmatprep.subr.bf16.mxu0 0
    %564 = vmatpush1.bf16.msra.mxu0 0
    %565 = vmatprep.mubr.bf16.mxu0 0
    %566 = vmatmul.mubr.bf16.gmra.mrb[0].mxu0 %v475
    %v567 = vpop.f32.mrb[0].mxu0
    %v568 = vadd.f32 %v446, %v567
    %v569 = vpop.f32.mrb[0].mxu0
    %v570 = vadd.f32 %v446, %v569
    %v571 = vpop.f32.mrb[0].mxu0
    %v572 = vadd.f32 %v451, %v571
    %v573 = vpop.f32.mrb[0].mxu0
    %v574 = vadd.f32 %v451, %v573
    %575 = vmatprep.mubr.bf16.mxu0 0
    %576 = vmatmul.mubr.bf16.gmra.mrb[0].mxu0 %v478
    %v577 = vpop.f32.mrb[0].mxu0
    %v578 = vadd.f32 %v456, %v577
    %v579 = vpop.f32.mrb[0].mxu0
    %v580 = vadd.f32 %v456, %v579
    %v581 = vpop.f32.mrb[0].mxu0
    %v582 = vadd.f32 %v461, %v581
    %v583 = vpop.f32.mrb[0].mxu0
    %v584 = vadd.f32 %v461, %v583
    %585 = vdwg.mxu0
    %v586 = vmax.f32 %v515, 0.0
    %v587 = vmax.f32 %v517, 0.0
    %v588 = vmax.f32 %v568, 0.0
    %v589 = vmax.f32 %v570, 0.0
    %v590 = vmax.f32 %v519, 0.0
    %v591 = vmax.f32 %v521, 0.0
    %v592 = vmax.f32 %v572, 0.0
    %v593 = vmax.f32 %v574, 0.0
    %v594 = vmax.f32 %v525, 0.0
    %v595 = vmax.f32 %v527, 0.0
    %v596 = vmax.f32 %v578, 0.0
    %v597 = vmax.f32 %v580, 0.0
    %v598 = vmax.f32 %v529, 0.0
    %v599 = vmax.f32 %v531, 0.0
    %v600 = vmax.f32 %v582, 0.0
    %v601 = vmax.f32 %v584, 0.0
    %v602 = vld [vmem:[#allocation7 + $0x10] sm:$0xf]
    %v603 = vld [vmem:[#allocation7 + $0x14] sm:$0xf]
    %v604 = vld [vmem:[#allocation5 + $0x60] sm:$0x3]
    %v605 = vpack.c.bf16 %v590, %v586
    %v606 = vpack.c.bf16 %v591, %v587
    %v607 = vpack.c.bf16 %v592, %v588
    %v608 = vpack.c.bf16 %v593, %v589
    %v609 = vpack.c.bf16 %v598, %v594
    %v610 = vpack.c.bf16 %v599, %v595
    %v611 = vpack.c.bf16 %v600, %v596
    %v612 = vpack.c.bf16 %v601, %v597
    %v615 = vunpack.c.l.b16 %v602
    %v616 = vunpack.c.l.b16 %v603
    %v617 = vpack.c.b16 %v616, %v615
    %v619 = vsel %vm473, %v617, 0
    %621 = vmatprep.subr.bf16.mxu0 %v606
    %622 = vmatpush1.bf16.msra.mxu0 %v605
    %623 = vmatprep.subr.bf16.mxu0 %v610
    %624 = vmatpush1.bf16.msra.mxu0 %v609
    %625 = vmatprep.subr.bf16.mxu0 0
    %626 = vmatpush1.bf16.msra.mxu0 0
    %627 = vmatprep.subr.bf16.mxu0 0
    %628 = vmatpush1.bf16.msra.mxu0 0
    %629 = vmatprep.subr.bf16.mxu0 0
    %630 = vmatpush1.bf16.msra.mxu0 0
    %631 = vmatprep.subr.bf16.mxu0 0
    %632 = vmatpush1.bf16.msra.mxu0 0
    %633 = vmatprep.subr.bf16.mxu0 0
    %634 = vmatpush1.bf16.msra.mxu0 0
    %635 = vmatprep.subr.bf16.mxu0 0
    %636 = vmatpush1.bf16.msra.mxu0 0
    %637 = vmatprep.subr.bf16.mxu0 0
    %638 = vmatpush1.bf16.msra.mxu0 0
    %639 = vmatprep.subr.bf16.mxu0 0
    %640 = vmatpush1.bf16.msra.mxu0 0
    %641 = vmatprep.subr.bf16.mxu0 0
    %642 = vmatpush1.bf16.msra.mxu0 0
    %643 = vmatprep.subr.bf16.mxu0 0
    %644 = vmatpush1.bf16.msra.mxu0 0
    %645 = vmatprep.subr.bf16.mxu0 0
    %646 = vmatpush1.bf16.msra.mxu0 0
    %647 = vmatprep.subr.bf16.mxu0 0
    %648 = vmatpush1.bf16.msra.mxu0 0
    %649 = vmatprep.subr.bf16.mxu0 0
    %650 = vmatpush1.bf16.msra.mxu0 0
    %651 = vmatprep.subr.bf16.mxu0 0
    %652 = vmatpush1.bf16.msra.mxu0 0
    %653 = vmatprep.mubr.bf16.mxu0 0
    %654 = vmatmul.mubr.bf16.gmra.mrb[0].mxu0 %v619
    %v655 = vpop.f32.mrb[0].mxu0
    %v656 = vadd.f32 0.0, %v655
    %v657 = vpop.f32.mrb[0].mxu0
    %v658 = vadd.f32 0.0, %v657
    %v659 = vpop.f32.mrb[0].mxu0
    %v660 = vpop.f32.mrb[0].mxu0
    %661 = vdwg.mxu0
    %662 = vmatprep.subr.bf16.mxu0 %v608
    %663 = vmatpush1.bf16.msra.mxu0 %v607
    %664 = vmatprep.subr.bf16.mxu0 %v612
    %665 = vmatpush1.bf16.msra.mxu0 %v611
    %666 = vmatprep.subr.bf16.mxu0 0
    %667 = vmatpush1.bf16.msra.mxu0 0
    %668 = vmatprep.subr.bf16.mxu0 0
    %669 = vmatpush1.bf16.msra.mxu0 0
    %670 = vmatprep.subr.bf16.mxu0 0
    %671 = vmatpush1.bf16.msra.mxu0 0
    %672 = vmatprep.subr.bf16.mxu0 0
    %673 = vmatpush1.bf16.msra.mxu0 0
    %674 = vmatprep.subr.bf16.mxu0 0
    %675 = vmatpush1.bf16.msra.mxu0 0
    %676 = vmatprep.subr.bf16.mxu0 0
    %677 = vmatpush1.bf16.msra.mxu0 0
    %678 = vmatprep.subr.bf16.mxu0 0
    %679 = vmatpush1.bf16.msra.mxu0 0
    %680 = vmatprep.subr.bf16.mxu0 0
    %681 = vmatpush1.bf16.msra.mxu0 0
    %682 = vmatprep.subr.bf16.mxu0 0
    %683 = vmatpush1.bf16.msra.mxu0 0
    %684 = vmatprep.subr.bf16.mxu0 0
    %685 = vmatpush1.bf16.msra.mxu0 0
    %686 = vmatprep.subr.bf16.mxu0 0
    %687 = vmatpush1.bf16.msra.mxu0 0
    %688 = vmatprep.subr.bf16.mxu0 0
    %689 = vmatpush1.bf16.msra.mxu0 0
    %690 = vmatprep.subr.bf16.mxu0 0
    %691 = vmatpush1.bf16.msra.mxu0 0
    %692 = vmatprep.subr.bf16.mxu0 0
    %693 = vmatpush1.bf16.msra.mxu0 0
    %694 = vmatprep.mubr.bf16.mxu0 0
    %695 = vmatmul.mubr.bf16.gmra.mrb[0].mxu0 %v619
    %v696 = vpop.f32.mrb[0].mxu0
    %v697 = vadd.f32 0.0, %v696
    %v698 = vpop.f32.mrb[0].mxu0
    %v699 = vadd.f32 0.0, %v698
    %v700 = vpop.f32.mrb[0].mxu0
    %v701 = vpop.f32.mrb[0].mxu0
    %702 = vdwg.mxu0
    %704 = vset.pattern.permute.xlu0 0
    %705 = vperm.xlu0 %704, %v604
    %v706 = vpop.permute.xlu0 %705
    %v708 = vadd.f32 %v656, %v706
    %v709 = vadd.f32 %v658, %v706
    %v710 = vadd.f32 %v697, %v706
    %v711 = vadd.f32 %v699, %v706
    %v712 = vtanh.pop %v708
    %v713 = vtanh.pop %v709
    %v714 = vtanh.pop %v710
    %v715 = vtanh.pop %v711
    %v720 = vcombine.low %v712, %v713
    %v721 = vcombine.low %v714, %v715
    %v723 = vunpack.c.l.s4 1983009808
    %v724 = vunpack.c.0.s8 %v723
    %v725 = vlaneseq
    %v726 = vshrl.u32 %v725, 7
    %v727 = vsub.s32 %v724, %v726
    %v728 = vrot.slane %v720, %v727
    %v730 = vunpack.c.l.s4 1983009808
    %v731 = vunpack.c.0.s8 %v730
    %v732 = vlaneseq
    %v733 = vshrl.u32 %v732, 7
    %v734 = vsub.s32 %v731, %v733
    %v735 = vrot.slane %v721, %v734
    %v736 = vcombine.low %v728, %v735
    %738 = vst [vmem:[#allocation8] sm:$0xff] %v736
    // Predicated region
    $region26: #{tpu_custom_call.1} parent=1 // pred_check
      _
    $region27: #{tpu_custom_call.1} parent=1 // pred_check_branch
      %740 = sbr.rel (0) target = $region29
    $region28: #{tpu_custom_call.1} parent=1 // pred_region
      %s742 = ssub.s32 128, 128
      %743 = vsyncadd [#allocation4], %s742
      %s745 = sshll.u32 [#allocation8], 4
      %s746 = int_to_ptr.vmem [resolvable:$true] %s745
      %748 = dma.vmem_to_hbm [thread:$0]  %s746, 128, %s3, [#allocation4]
    $region29: #{tpu_custom_call.1} parent=1 // pred_fallthru
      _
    // Predicated region
    $region30: #{tpu_custom_call.1} parent=1 // pred_check
      _
    $region31: #{tpu_custom_call.1} parent=1 // pred_check_branch
      %750 = sbr.rel (0) target = $region33
    $region32: #{tpu_custom_call.1} parent=1 // pred_region
      %751 = dma.done [#allocation4], 128
    $region33: #{tpu_custom_call.1} parent=1 // pred_fallthru
      _
    %752 = vsyncpa [#allocation3], 1
    %753 = vsyncpa [#allocation6], 1
    %754 = vsyncpa [#allocation4], 1

</llo_original>
